<compile_context>
chip_gen: v7x
topology: tpu7x:2x2x1
jax: 0.10.0
libtpu: 0.0.40
codegen_flags: <defaults>
</compile_context>

<pallas_src>
import functools

import jax
import jax.numpy as jnp
from jax.experimental import pallas as pl
from jax.experimental.pallas import tpu as pltpu


# ------------------------- Pallas kernels -------------------------


def _mlp_eval_kernel(x_ref, w1_ref, b1_ref, w2_ref, b2_ref, o_ref):
    """out = relu(x @ W1 + b1) @ W2 + b2   (dropout is identity in eval)."""
    h = jnp.dot(x_ref[...], w1_ref[...], preferred_element_type=jnp.float32)
    h = jnp.maximum(h + b1_ref[...], 0.0)
    o = jnp.dot(h.astype(w2_ref.dtype), w2_ref[...],
                preferred_element_type=jnp.float32)
    o_ref[...] = (o + b2_ref[...]).astype(o_ref.dtype)


def _mlp_train_kernel(x_ref, bits_ref, w1_ref, b1_ref, w2_ref, b2_ref, o_ref,
                      *, threshold, inv_keep):
    """Same as eval kernel but with inverted dropout on the hidden layer.

    keep iff bits >= threshold  (threshold = round(p * 2^32)) -> P(keep) = 1-p.
    Integer compare + single jnp.where keeps VPU work minimal.
    """
    h = jnp.dot(x_ref[...], w1_ref[...], preferred_element_type=jnp.float32)
    h = jnp.maximum(h + b1_ref[...], 0.0)
    keep = bits_ref[...] >= jnp.uint32(threshold)
    h = jnp.where(keep, h * inv_keep, 0.0)
    o = jnp.dot(h.astype(w2_ref.dtype), w2_ref[...],
                preferred_element_type=jnp.float32)
    o_ref[...] = (o + b2_ref[...]).astype(o_ref.dtype)


# ------------------------- wrapper -------------------------


def _round_up(x, m):
    return ((x + m - 1) // m) * m


def mlp_forward(node_attr, w1, b1, w2, b2, *, p_dropout=0.5, training=False,
                rng_key=None, tile_m=1024):
    """node_attr: [N, F].  w1: [F, H], b1: [H], w2: [H, C], b2: [C].

    Returns logits [N, C].  Dropout is applied only when training=True
    (matches F.dropout(..., training=self.training)).
    """
    n, f = node_attr.shape
    h_dim = w1.shape[1]
    c_dim = w2.shape[1]
    dtype = node_attr.dtype

    # ---- lane-dense padding of hidden / output feature dims (multiples of 128)
    h_pad = _round_up(h_dim, 128)
    c_pad = _round_up(c_dim, 128)
    w1p = jnp.zeros((f, h_pad), dtype).at[:, :h_dim].set(w1)
    b1p = jnp.zeros((1, h_pad), dtype).at[0, :h_dim].set(b1)
    w2p = jnp.zeros((h_pad, c_pad), dtype).at[:h_dim, :c_dim].set(w2)
    b2p = jnp.zeros((1, c_pad), dtype).at[0, :c_dim].set(b2)

    # ---- row tiling: one big block for small N, tile_m rows otherwise
    tm = min(tile_m, _round_up(n, 8))
    n_pad = _round_up(n, tm)
    x = node_attr
    if n_pad != n:
        x = jnp.pad(x, ((0, n_pad - n), (0, 0)))
    grid = (n_pad // tm,)

    x_spec = pl.BlockSpec((tm, f), lambda i: (i, 0))
    w1_spec = pl.BlockSpec((f, h_pad), lambda i: (0, 0))
    b1_spec = pl.BlockSpec((1, h_pad), lambda i: (0, 0))
    w2_spec = pl.BlockSpec((h_pad, c_pad), lambda i: (0, 0))
    b2_spec = pl.BlockSpec((1, c_pad), lambda i: (0, 0))
    o_spec = pl.BlockSpec((tm, c_pad), lambda i: (i, 0))
    out_shape = jax.ShapeDtypeStruct((n_pad, c_pad), dtype)
    cparams = pltpu.CompilerParams(dimension_semantics=("parallel",))

    if not training or p_dropout == 0.0:
        out = pl.pallas_call(
            _mlp_eval_kernel,
            out_shape=out_shape,
            grid=grid,
            in_specs=[x_spec, w1_spec, b1_spec, w2_spec, b2_spec],
            out_specs=o_spec,
            compiler_params=cparams,
        )(x, w1p, b1p, w2p, b2p)
        return out[:n, :c_dim]

    # ---- training-mode dropout
    assert 0.0 <= p_dropout < 1.0, "p_dropout must be in [0, 1) for training"
    if rng_key is None:
        rng_key = jax.random.PRNGKey(0)
    # Random uint32 bits for the hidden activation (padded hidden cols are zero
    # before dropout, so masking them is harmless).
    bits = jax.random.bits(rng_key, (n_pad, h_pad), dtype=jnp.uint32)
    bits_spec = pl.BlockSpec((tm, h_pad), lambda i: (i, 0))
    threshold = min(int(round(p_dropout * 2.0 ** 32)), 2 ** 32 - 1)
    inv_keep = 1.0 / (1.0 - p_dropout)

    out = pl.pallas_call(
        functools.partial(_mlp_train_kernel, threshold=threshold,
                          inv_keep=inv_keep),
        out_shape=out_shape,
        grid=grid,
        in_specs=[x_spec, bits_spec, w1_spec, b1_spec, w2_spec, b2_spec],
        out_specs=o_spec,
        compiler_params=cparams,
    )(x, bits, w1p, b1p, w2p, b2p)
    return out[:n, :c_dim]


# ------------------------- parameter init (deterministic) -------------------------


def init_mlp_params(key, n_features, n_hidden, n_classes, dtype=jnp.float32):
    """Mimics nn.Linear default init: U(-1/sqrt(fan_in), 1/sqrt(fan_in)).
    Weights are stored transposed ([in, out]) relative to PyTorch."""
    k1, k2, k3, k4 = jax.random.split(key, 4)
    bound1 = 1.0 / jnp.sqrt(n_features)
    bound2 = 1.0 / jnp.sqrt(n_hidden)
    w1 = jax.random.uniform(k1, (n_features, n_hidden), dtype, -bound1, bound1)
    b1 = jax.random.uniform(k2, (n_hidden,), dtype, -bound1, bound1)
    w2 = jax.random.uniform(k3, (n_hidden, n_classes), dtype, -bound2, bound2)
    b2 = jax.random.uniform(k4, (n_classes,), dtype, -bound2, bound2)
    return w1, b1, w2, b2


if __name__ == "__main__":
    key = jax.random.PRNGKey(0)
    k_x, k_p, k_e, k_d = jax.random.split(key, 4)

    n_nodes, n_features, n_hidden, n_classes = 256, 16, 32, 8

    # "X.x" — node feature matrix
    node_attr = jax.random.normal(k_x, (n_nodes, n_features), dtype=jnp.float32)
    # "X.edge_index" — unpacked but unused by MLP.forward; kept for fidelity
    edge_index = jax.random.randint(k_e, (2, 512), 0, n_nodes, dtype=jnp.int32)

    w1, b1, w2, b2 = init_mlp_params(k_p, n_features, n_hidden, n_classes)

    # eval-mode forward (dropout is identity), matching model.eval() semantics
    out = mlp_forward(node_attr, w1, b1, w2, b2, p_dropout=0.5, training=False)
    out = jax.block_until_ready(out)

    # correctness check vs. plain-JAX reference
    ref = jnp.maximum(node_attr @ w1 + b1, 0.0) @ w2 + b2
    assert out.shape == (n_nodes, n_classes)
    assert jnp.allclose(out, ref, atol=1e-5, rtol=1e-5)

    # training-mode (dropout) kernel
    out_tr = jax.block_until_ready(
        mlp_forward(node_attr, w1, b1, w2, b2, p_dropout=0.5, training=True,
                    rng_key=k_d))
    assert out_tr.shape == (n_nodes, n_classes)
    assert bool(jnp.all(jnp.isfinite(out_tr)))

    print("KERNEL_OK")
</pallas_src>

<mosaic_0001>
module attributes {stable_mosaic.version = 11 : i64} {
  func.func @_mlp_eval_kernel(%arg0: i32, %arg1: memref<256x16xf32, #tpu.memory_space<vmem>>, %arg2: memref<16x128xf32, #tpu.memory_space<vmem>>, %arg3: memref<1x128xf32, #tpu.memory_space<vmem>>, %arg4: memref<128x128xf32, #tpu.memory_space<vmem>>, %arg5: memref<1x128xf32, #tpu.memory_space<vmem>>, %arg6: memref<256x128xf32, #tpu.memory_space<vmem>>) attributes {dimension_semantics = [#tpu.dimension_semantics<parallel>], iteration_bounds = array<i64: 1>, scalar_prefetch = 0 : i64, scratch_operands = 0 : i64, tpu.core_type = #tpu.core_type<tc>, window_params = [{transform_indices = @transform_0, window_bounds = array<i64: 256, 16>}, {pipeline_mode = #tpu.pipeline_mode<synchronous>, transform_indices = @transform_1, window_bounds = array<i64: 16, 128>}, {pipeline_mode = #tpu.pipeline_mode<synchronous>, transform_indices = @transform_2, window_bounds = array<i64: 1, 128>}, {pipeline_mode = #tpu.pipeline_mode<synchronous>, transform_indices = @transform_3, window_bounds = array<i64: 128, 128>}, {pipeline_mode = #tpu.pipeline_mode<synchronous>, transform_indices = @transform_4, window_bounds = array<i64: 1, 128>}, {transform_indices = @transform_5, window_bounds = array<i64: 256, 128>}]} {
    %c0 = arith.constant 0 : index
    %c0_0 = arith.constant 0 : index
    %0 = vector.load %arg1[%c0, %c0_0] : memref<256x16xf32, #tpu.memory_space<vmem>>, vector<256x16xf32>
    %c0_1 = arith.constant 0 : index
    %c0_2 = arith.constant 0 : index
    %1 = vector.load %arg2[%c0_1, %c0_2] : memref<16x128xf32, #tpu.memory_space<vmem>>, vector<16x128xf32>
    %cst = arith.constant dense<0.000000e+00> : vector<256x128xf32>
    %2 = tpu.matmul %0, %1, %cst {dimension_numbers = #tpu.dot_dimension_numbers<[1], [0], [0], [1], [0, 0, 1, 1], [], []>} : vector<256x16xf32>, vector<16x128xf32>, vector<256x128xf32> -> vector<256x128xf32>
    %c0_3 = arith.constant 0 : index
    %c0_4 = arith.constant 0 : index
    %3 = vector.load %arg3[%c0_3, %c0_4] : memref<1x128xf32, #tpu.memory_space<vmem>>, vector<1x128xf32>
    %4 = vector.broadcast %3 : vector<1x128xf32> to vector<256x128xf32>
    %5 = arith.addf %2, %4 : vector<256x128xf32>
    %cst_5 = arith.constant 0.000000e+00 : f32
    %6 = vector.broadcast %cst_5 : f32 to vector<256x128xf32>
    %7 = arith.maximumf %5, %6 : vector<256x128xf32>
    %c0_6 = arith.constant 0 : index
    %c0_7 = arith.constant 0 : index
    %8 = vector.load %arg4[%c0_6, %c0_7] : memref<128x128xf32, #tpu.memory_space<vmem>>, vector<128x128xf32>
    %cst_8 = arith.constant dense<0.000000e+00> : vector<256x128xf32>
    %9 = tpu.matmul %7, %8, %cst_8 {dimension_numbers = #tpu.dot_dimension_numbers<[1], [0], [0], [1], [0, 0, 1, 1], [], []>} : vector<256x128xf32>, vector<128x128xf32>, vector<256x128xf32> -> vector<256x128xf32>
    %c0_9 = arith.constant 0 : index
    %c0_10 = arith.constant 0 : index
    %10 = vector.load %arg5[%c0_9, %c0_10] : memref<1x128xf32, #tpu.memory_space<vmem>>, vector<1x128xf32>
    %11 = vector.broadcast %10 : vector<1x128xf32> to vector<256x128xf32>
    %12 = arith.addf %9, %11 : vector<256x128xf32>
    %c0_11 = arith.constant 0 : index
    %c0_12 = arith.constant 0 : index
    %13 = vector.load %arg6[%c0_11, %c0_12] : memref<256x128xf32, #tpu.memory_space<vmem>>, vector<256x128xf32>
    tpu.vector_store %arg6[%c0_11, %c0_12], %12 {strides = array<i32>} : memref<256x128xf32, #tpu.memory_space<vmem>>, vector<256x128xf32>,
    return
  }
  func.func @transform_0(%arg0: i32) -> (i32, i32) {
    %c0_i32 = arith.constant 0 : i32
    %c0_i32_0 = arith.constant 0 : i32
    return %arg0, %c0_i32 : i32, i32
  }
  func.func @transform_1(%arg0: i32) -> (i32, i32) {
    %c0_i32 = arith.constant 0 : i32
    %c0_i32_0 = arith.constant 0 : i32
    %c0_i32_1 = arith.constant 0 : i32
    return %c0_i32, %c0_i32_0 : i32, i32
  }
  func.func @transform_2(%arg0: i32) -> (i32, i32) {
    %c0_i32 = arith.constant 0 : i32
    %c0_i32_0 = arith.constant 0 : i32
    %c0_i32_1 = arith.constant 0 : i32
    return %c0_i32, %c0_i32_0 : i32, i32
  }
  func.func @transform_3(%arg0: i32) -> (i32, i32) {
    %c0_i32 = arith.constant 0 : i32
    %c0_i32_0 = arith.constant 0 : i32
    %c0_i32_1 = arith.constant 0 : i32
    return %c0_i32, %c0_i32_0 : i32, i32
  }
  func.func @transform_4(%arg0: i32) -> (i32, i32) {
    %c0_i32 = arith.constant 0 : i32
    %c0_i32_0 = arith.constant 0 : i32
    %c0_i32_1 = arith.constant 0 : i32
    return %c0_i32, %c0_i32_0 : i32, i32
  }
  func.func @transform_5(%arg0: i32) -> (i32, i32) {
    %c0_i32 = arith.constant 0 : i32
    %c0_i32_0 = arith.constant 0 : i32
    return %arg0, %c0_i32 : i32, i32
  }
}

</mosaic_0001>

<llo_original>
// kernel: tpu_custom_call.1
$region0: #{tpu_custom_call.1}
  #allocation0 [shape = 'u32[]', space=smem, size = 0x4, offset = 0x4, fixed_abs, tag = 'smem constant byte address 0x4 - core index']
  #allocation1 [shape = 'u32[144,128]{1,0:T(1,128)}', space=vmem, size = 0x12000, scoped, tag = 'internal scratch']
  %s0 = inlined_call_operand.vmem [shape: f32[256,16], index: 0, kind: input, shape index: {}]
  %s1 = inlined_call_operand.vmem [shape: f32[16,128], index: 1, kind: input, shape index: {}]
  %s2 = inlined_call_operand.vmem [shape: f32[1,128], index: 2, kind: input, shape index: {}]
  %s3 = inlined_call_operand.vmem [shape: f32[128,128], index: 3, kind: input, shape index: {}]
  %s4 = inlined_call_operand.vmem [shape: f32[1,128], index: 4, kind: input, shape index: {}]
  %s5 = inlined_call_operand.hbm [shape: f32[256,128], index: 5, kind: output, shape index: {}]
  %s6 = sld [smem:[#allocation0]]
  $region30: #{tpu_custom_call.1} parent=0
    _
  %s8 = ssub.s32 1, %s6
  %s9 = scalar_select 0, %s8, %s6
  $region1: #{tpu_custom_call.1} parent=0
    #allocation2 [shape = 'u8[131072]{0}', space=vmem, size = 0x20000, scoped, tag = 'output window, operand 0, single buffered']
    #allocation3 [shape = 's32[1]{0}', space=sflag, size = 0x4, scoped, tag = 'scoped memory for tpu_custom_call.1']
    %10 = vsyncpa [#allocation3], 0
    // Predicated region
    $region2: #{tpu_custom_call.1} parent=1 // pred_check
      _
    $region3: #{tpu_custom_call.1} parent=1 // pred_check_branch
      %12 = sbr.rel (0) target = $region5
    $region4: #{tpu_custom_call.1} parent=1 // pred_region
      _
    $region5: #{tpu_custom_call.1} parent=1 // pred_fallthru
      _
    // Predicated region
    $region6: #{tpu_custom_call.1} parent=1 // pred_check
      _
    $region7: #{tpu_custom_call.1} parent=1 // pred_check_branch
      %14 = sbr.rel (0) target = $region9
    $region8: #{tpu_custom_call.1} parent=1 // pred_region
      _
    $region9: #{tpu_custom_call.1} parent=1 // pred_fallthru
      _
    // Predicated region
    $region10: #{tpu_custom_call.1} parent=1 // pred_check
      _
    $region11: #{tpu_custom_call.1} parent=1 // pred_check_branch
      %16 = sbr.rel (0) target = $region13
    $region12: #{tpu_custom_call.1} parent=1 // pred_region
      _
    $region13: #{tpu_custom_call.1} parent=1 // pred_fallthru
      _
    // Predicated region
    $region14: #{tpu_custom_call.1} parent=1 // pred_check
      _
    $region15: #{tpu_custom_call.1} parent=1 // pred_check_branch
      %18 = sbr.rel (0) target = $region17
    $region16: #{tpu_custom_call.1} parent=1 // pred_region
      _
    $region17: #{tpu_custom_call.1} parent=1 // pred_fallthru
      _
    // Predicated region
    $region18: #{tpu_custom_call.1} parent=1 // pred_check
      _
    $region19: #{tpu_custom_call.1} parent=1 // pred_check_branch
      %20 = sbr.rel (0) target = $region21
    $region20: #{tpu_custom_call.1} parent=1 // pred_region
      _
    $region21: #{tpu_custom_call.1} parent=1 // pred_fallthru
      _
    %v21 = vld [vmem:[%s0] sm:$0xff]
    %v22 = vld [vmem:[%s0 + $0x8] sm:$0xff]
    %v23 = vld [vmem:[%s0 + $0x10] sm:$0xff]
    %v24 = vld [vmem:[%s0 + $0x18] sm:$0xff]
    %v25 = vld [vmem:[%s0 + $0x20] sm:$0xff]
    %v26 = vld [vmem:[%s0 + $0x28] sm:$0xff]
    %v27 = vld [vmem:[%s0 + $0x30] sm:$0xff]
    %v28 = vld [vmem:[%s0 + $0x38] sm:$0xff]
    %v29 = vld [vmem:[%s0 + $0x40] sm:$0xff]
    %v30 = vld [vmem:[%s0 + $0x48] sm:$0xff]
    %v31 = vld [vmem:[%s0 + $0x50] sm:$0xff]
    %v32 = vld [vmem:[%s0 + $0x58] sm:$0xff]
    %v33 = vld [vmem:[%s0 + $0x60] sm:$0xff]
    %v34 = vld [vmem:[%s0 + $0x68] sm:$0xff]
    %v35 = vld [vmem:[%s0 + $0x70] sm:$0xff]
    %v36 = vld [vmem:[%s0 + $0x78] sm:$0xff]
    %v37 = vld [vmem:[%s0 + $0x80] sm:$0xff]
    %v38 = vld [vmem:[%s0 + $0x88] sm:$0xff]
    %v39 = vld [vmem:[%s0 + $0x90] sm:$0xff]
    %v40 = vld [vmem:[%s0 + $0x98] sm:$0xff]
    %v41 = vld [vmem:[%s0 + $0xa0] sm:$0xff]
    %v42 = vld [vmem:[%s0 + $0xa8] sm:$0xff]
    %v43 = vld [vmem:[%s0 + $0xb0] sm:$0xff]
    %v44 = vld [vmem:[%s0 + $0xb8] sm:$0xff]
    %v45 = vld [vmem:[%s0 + $0xc0] sm:$0xff]
    %v46 = vld [vmem:[%s0 + $0xc8] sm:$0xff]
    %v47 = vld [vmem:[%s0 + $0xd0] sm:$0xff]
    %v48 = vld [vmem:[%s0 + $0xd8] sm:$0xff]
    %v49 = vld [vmem:[%s0 + $0xe0] sm:$0xff]
    %v50 = vld [vmem:[%s0 + $0xe8] sm:$0xff]
    %v51 = vld [vmem:[%s0 + $0xf0] sm:$0xff]
    %v52 = vld [vmem:[%s0 + $0xf8] sm:$0xff]
    %v53 = vld [vmem:[%s1] sm:$0xff]
    %v54 = vld [vmem:[%s1 + $0x8] sm:$0xff]
    %v55 = vld [vmem:[%s2] sm:$0x1]
    %v57 = vlaneseq
    %v58 = vshrl.u32 %v57, 7
    %v59 = vsub.s32 0, %v58
    %v60 = vrot.slane %v55, %v59
    %vm62 = vcmask 130048
    %v64 = vsel %vm62, %v21, 0
    %v67 = vsel %vm62, %v22, 0
    %v70 = vsel %vm62, %v23, 0
    %v73 = vsel %vm62, %v24, 0
    %v76 = vsel %vm62, %v25, 0
    %v79 = vsel %vm62, %v26, 0
    %v82 = vsel %vm62, %v27, 0
    %v85 = vsel %vm62, %v28, 0
    %v88 = vsel %vm62, %v29, 0
    %v91 = vsel %vm62, %v30, 0
    %v94 = vsel %vm62, %v31, 0
    %v97 = vsel %vm62, %v32, 0
    %v100 = vsel %vm62, %v33, 0
    %v103 = vsel %vm62, %v34, 0
    %v106 = vsel %vm62, %v35, 0
    %v109 = vsel %vm62, %v36, 0
    %v112 = vsel %vm62, %v37, 0
    %v115 = vsel %vm62, %v38, 0
    %v118 = vsel %vm62, %v39, 0
    %v121 = vsel %vm62, %v40, 0
    %v124 = vsel %vm62, %v41, 0
    %v127 = vsel %vm62, %v42, 0
    %v130 = vsel %vm62, %v43, 0
    %v133 = vsel %vm62, %v44, 0
    %v136 = vsel %vm62, %v45, 0
    %v139 = vsel %vm62, %v46, 0
    %v142 = vsel %vm62, %v47, 0
    %v145 = vsel %vm62, %v48, 0
    %v148 = vsel %vm62, %v49, 0
    %v151 = vsel %vm62, %v50, 0
    %v154 = vsel %vm62, %v51, 0
    %v157 = vsel %vm62, %v52, 0
    %159 = vmatprep.subr.mxu0 0.0
    %160 = vmatpush1.msra.mxu0 %v53
    %161 = vmatprep.subr.mxu0 0.0
    %162 = vmatpush1.msra.mxu0 %v54
    %163 = vmatprep.subr.mxu0 0.0
    %164 = vmatpush1.msra.mxu0 0.0
    %165 = vmatprep.subr.mxu0 0.0
    %166 = vmatpush1.msra.mxu0 0.0
    %167 = vmatprep.subr.mxu0 0.0
    %168 = vmatpush1.msra.mxu0 0.0
    %169 = vmatprep.subr.mxu0 0.0
    %170 = vmatpush1.msra.mxu0 0.0
    %171 = vmatprep.subr.mxu0 0.0
    %172 = vmatpush1.msra.mxu0 0.0
    %173 = vmatprep.subr.mxu0 0.0
    %174 = vmatpush1.msra.mxu0 0.0
    %175 = vmatprep.subr.mxu0 0.0
    %176 = vmatpush1.msra.mxu0 0.0
    %177 = vmatprep.subr.mxu0 0.0
    %178 = vmatpush1.msra.mxu0 0.0
    %179 = vmatprep.subr.mxu0 0.0
    %180 = vmatpush1.msra.mxu0 0.0
    %181 = vmatprep.subr.mxu0 0.0
    %182 = vmatpush1.msra.mxu0 0.0
    %183 = vmatprep.subr.mxu0 0.0
    %184 = vmatpush1.msra.mxu0 0.0
    %185 = vmatprep.subr.mxu0 0.0
    %186 = vmatpush1.msra.mxu0 0.0
    %187 = vmatprep.subr.mxu0 0.0
    %188 = vmatpush1.msra.mxu0 0.0
    %189 = vmatprep.subr.mxu0 0.0
    %190 = vmatpush1.msra.mxu0 0.0
    %191 = vmatprep.subr.mxu0 0.0
    %192 = vmatpush1.msra.mxu0 0.0
    %193 = vmatprep.subr.mxu0 0.0
    %194 = vmatpush1.msra.mxu0 0.0
    %195 = vmatprep.subr.mxu0 0.0
    %196 = vmatpush1.msra.mxu0 0.0
    %197 = vmatprep.subr.mxu0 0.0
    %198 = vmatpush1.msra.mxu0 0.0
    %199 = vmatprep.subr.mxu0 0.0
    %200 = vmatpush1.msra.mxu0 0.0
    %201 = vmatprep.subr.mxu0 0.0
    %202 = vmatpush1.msra.mxu0 0.0
    %203 = vmatprep.subr.mxu0 0.0
    %204 = vmatpush1.msra.mxu0 0.0
    %205 = vmatprep.subr.mxu0 0.0
    %206 = vmatpush1.msra.mxu0 0.0
    %207 = vmatprep.subr.mxu0 0.0
    %208 = vmatpush1.msra.mxu0 0.0
    %209 = vmatprep.subr.mxu0 0.0
    %210 = vmatpush1.msra.mxu0 0.0
    %211 = vmatprep.subr.mxu0 0.0
    %212 = vmatpush1.msra.mxu0 0.0
    %213 = vmatprep.subr.mxu0 0.0
    %214 = vmatpush1.msra.mxu0 0.0
    %215 = vmatprep.subr.mxu0 0.0
    %216 = vmatpush1.msra.mxu0 0.0
    %217 = vmatprep.subr.mxu0 0.0
    %218 = vmatpush1.msra.mxu0 0.0
    %219 = vmatprep.subr.mxu0 0.0
    %220 = vmatpush1.msra.mxu0 0.0
    %221 = vmatprep.subr.mxu0 0.0
    %222 = vmatpush1.msra.mxu0 0.0
    %223 = vmatprep.mubr.f32.mxu0 0.0
    %224 = vmatmul.mubr.f32.gmra.mrb[0].mxu0 %v64
    %v225 = vpop.f32.mrb[0].mxu0
    %v226 = vadd.f32 %v60, %v225
    %v227 = vpop.f32.mrb[0].mxu0
    %228 = vmatprep.mubr.f32.mxu0 0.0
    %229 = vmatmul.mubr.f32.gmra.mrb[0].mxu0 %v67
    %v230 = vpop.f32.mrb[0].mxu0
    %v231 = vadd.f32 %v60, %v230
    %v232 = vpop.f32.mrb[0].mxu0
    %233 = vmatprep.mubr.f32.mxu0 0.0
    %234 = vmatmul.mubr.f32.gmra.mrb[0].mxu0 %v70
    %v235 = vpop.f32.mrb[0].mxu0
    %v236 = vadd.f32 %v60, %v235
    %v237 = vpop.f32.mrb[0].mxu0
    %238 = vmatprep.mubr.f32.mxu0 0.0
    %239 = vmatmul.mubr.f32.gmra.mrb[0].mxu0 %v73
    %v240 = vpop.f32.mrb[0].mxu0
    %v241 = vadd.f32 %v60, %v240
    %v242 = vpop.f32.mrb[0].mxu0
    %243 = vmatprep.mubr.f32.mxu0 0.0
    %244 = vmatmul.mubr.f32.gmra.mrb[0].mxu0 %v76
    %v245 = vpop.f32.mrb[0].mxu0
    %v246 = vadd.f32 %v60, %v245
    %v247 = vpop.f32.mrb[0].mxu0
    %248 = vmatprep.mubr.f32.mxu0 0.0
    %249 = vmatmul.mubr.f32.gmra.mrb[0].mxu0 %v79
    %v250 = vpop.f32.mrb[0].mxu0
    %v251 = vadd.f32 %v60, %v250
    %v252 = vpop.f32.mrb[0].mxu0
    %253 = vmatprep.mubr.f32.mxu0 0.0
    %254 = vmatmul.mubr.f32.gmra.mrb[0].mxu0 %v82
    %v255 = vpop.f32.mrb[0].mxu0
    %v256 = vadd.f32 %v60, %v255
    %v257 = vpop.f32.mrb[0].mxu0
    %258 = vmatprep.mubr.f32.mxu0 0.0
    %259 = vmatmul.mubr.f32.gmra.mrb[0].mxu0 %v85
    %v260 = vpop.f32.mrb[0].mxu0
    %v261 = vadd.f32 %v60, %v260
    %v262 = vpop.f32.mrb[0].mxu0
    %263 = vmatprep.mubr.f32.mxu0 0.0
    %264 = vmatmul.mubr.f32.gmra.mrb[0].mxu0 %v88
    %v265 = vpop.f32.mrb[0].mxu0
    %v266 = vadd.f32 %v60, %v265
    %v267 = vpop.f32.mrb[0].mxu0
    %268 = vmatprep.mubr.f32.mxu0 0.0
    %269 = vmatmul.mubr.f32.gmra.mrb[0].mxu0 %v91
    %v270 = vpop.f32.mrb[0].mxu0
    %v271 = vadd.f32 %v60, %v270
    %v272 = vpop.f32.mrb[0].mxu0
    %273 = vmatprep.mubr.f32.mxu0 0.0
    %274 = vmatmul.mubr.f32.gmra.mrb[0].mxu0 %v94
    %v275 = vpop.f32.mrb[0].mxu0
    %v276 = vadd.f32 %v60, %v275
    %v277 = vpop.f32.mrb[0].mxu0
    %278 = vmatprep.mubr.f32.mxu0 0.0
    %279 = vmatmul.mubr.f32.gmra.mrb[0].mxu0 %v97
    %v280 = vpop.f32.mrb[0].mxu0
    %v281 = vadd.f32 %v60, %v280
    %v282 = vpop.f32.mrb[0].mxu0
    %283 = vmatprep.mubr.f32.mxu0 0.0
    %284 = vmatmul.mubr.f32.gmra.mrb[0].mxu0 %v100
    %v285 = vpop.f32.mrb[0].mxu0
    %v286 = vadd.f32 %v60, %v285
    %v287 = vpop.f32.mrb[0].mxu0
    %288 = vmatprep.mubr.f32.mxu0 0.0
    %289 = vmatmul.mubr.f32.gmra.mrb[0].mxu0 %v103
    %v290 = vpop.f32.mrb[0].mxu0
    %v291 = vadd.f32 %v60, %v290
    %v292 = vpop.f32.mrb[0].mxu0
    %293 = vmatprep.mubr.f32.mxu0 0.0
    %294 = vmatmul.mubr.f32.gmra.mrb[0].mxu0 %v106
    %v295 = vpop.f32.mrb[0].mxu0
    %v296 = vadd.f32 %v60, %v295
    %v297 = vpop.f32.mrb[0].mxu0
    %298 = vmatprep.mubr.f32.mxu0 0.0
    %299 = vmatmul.mubr.f32.gmra.mrb[0].mxu0 %v109
    %v300 = vpop.f32.mrb[0].mxu0
    %v301 = vadd.f32 %v60, %v300
    %v302 = vpop.f32.mrb[0].mxu0
    %303 = vmatprep.mubr.f32.mxu0 0.0
    %304 = vmatmul.mubr.f32.gmra.mrb[0].mxu0 %v112
    %v305 = vpop.f32.mrb[0].mxu0
    %v306 = vadd.f32 %v60, %v305
    %v307 = vpop.f32.mrb[0].mxu0
    %308 = vmatprep.mubr.f32.mxu0 0.0
    %309 = vmatmul.mubr.f32.gmra.mrb[0].mxu0 %v115
    %v310 = vpop.f32.mrb[0].mxu0
    %v311 = vadd.f32 %v60, %v310
    %v312 = vpop.f32.mrb[0].mxu0
    %313 = vmatprep.mubr.f32.mxu0 0.0
    %314 = vmatmul.mubr.f32.gmra.mrb[0].mxu0 %v118
    %v315 = vpop.f32.mrb[0].mxu0
    %v316 = vadd.f32 %v60, %v315
    %v317 = vpop.f32.mrb[0].mxu0
    %318 = vmatprep.mubr.f32.mxu0 0.0
    %319 = vmatmul.mubr.f32.gmra.mrb[0].mxu0 %v121
    %v320 = vpop.f32.mrb[0].mxu0
    %v321 = vadd.f32 %v60, %v320
    %v322 = vpop.f32.mrb[0].mxu0
    %323 = vmatprep.mubr.f32.mxu0 0.0
    %324 = vmatmul.mubr.f32.gmra.mrb[0].mxu0 %v124
    %v325 = vpop.f32.mrb[0].mxu0
    %v326 = vadd.f32 %v60, %v325
    %v327 = vpop.f32.mrb[0].mxu0
    %328 = vmatprep.mubr.f32.mxu0 0.0
    %329 = vmatmul.mubr.f32.gmra.mrb[0].mxu0 %v127
    %v330 = vpop.f32.mrb[0].mxu0
    %v331 = vadd.f32 %v60, %v330
    %v332 = vpop.f32.mrb[0].mxu0
    %333 = vmatprep.mubr.f32.mxu0 0.0
    %334 = vmatmul.mubr.f32.gmra.mrb[0].mxu0 %v130
    %v335 = vpop.f32.mrb[0].mxu0
    %v336 = vadd.f32 %v60, %v335
    %v337 = vpop.f32.mrb[0].mxu0
    %338 = vmatprep.mubr.f32.mxu0 0.0
    %339 = vmatmul.mubr.f32.gmra.mrb[0].mxu0 %v133
    %v340 = vpop.f32.mrb[0].mxu0
    %v341 = vadd.f32 %v60, %v340
    %v342 = vpop.f32.mrb[0].mxu0
    %343 = vmatprep.mubr.f32.mxu0 0.0
    %344 = vmatmul.mubr.f32.gmra.mrb[0].mxu0 %v136
    %v345 = vpop.f32.mrb[0].mxu0
    %v346 = vadd.f32 %v60, %v345
    %v347 = vpop.f32.mrb[0].mxu0
    %348 = vmatprep.mubr.f32.mxu0 0.0
    %349 = vmatmul.mubr.f32.gmra.mrb[0].mxu0 %v139
    %v350 = vpop.f32.mrb[0].mxu0
    %v351 = vadd.f32 %v60, %v350
    %v352 = vpop.f32.mrb[0].mxu0
    %353 = vmatprep.mubr.f32.mxu0 0.0
    %354 = vmatmul.mubr.f32.gmra.mrb[0].mxu0 %v142
    %v355 = vpop.f32.mrb[0].mxu0
    %v356 = vadd.f32 %v60, %v355
    %v357 = vpop.f32.mrb[0].mxu0
    %358 = vmatprep.mubr.f32.mxu0 0.0
    %359 = vmatmul.mubr.f32.gmra.mrb[0].mxu0 %v145
    %v360 = vpop.f32.mrb[0].mxu0
    %v361 = vadd.f32 %v60, %v360
    %v362 = vpop.f32.mrb[0].mxu0
    %363 = vmatprep.mubr.f32.mxu0 0.0
    %364 = vmatmul.mubr.f32.gmra.mrb[0].mxu0 %v148
    %v365 = vpop.f32.mrb[0].mxu0
    %v366 = vadd.f32 %v60, %v365
    %v367 = vpop.f32.mrb[0].mxu0
    %368 = vmatprep.mubr.f32.mxu0 0.0
    %369 = vmatmul.mubr.f32.gmra.mrb[0].mxu0 %v151
    %v370 = vpop.f32.mrb[0].mxu0
    %v371 = vadd.f32 %v60, %v370
    %v372 = vpop.f32.mrb[0].mxu0
    %373 = vmatprep.mubr.f32.mxu0 0.0
    %374 = vmatmul.mubr.f32.gmra.mrb[0].mxu0 %v154
    %v375 = vpop.f32.mrb[0].mxu0
    %v376 = vadd.f32 %v60, %v375
    %v377 = vpop.f32.mrb[0].mxu0
    %378 = vmatprep.mubr.f32.mxu0 0.0
    %379 = vmatmul.mubr.f32.gmra.mrb[0].mxu0 %v157
    %v380 = vpop.f32.mrb[0].mxu0
    %v381 = vadd.f32 %v60, %v380
    %v382 = vpop.f32.mrb[0].mxu0
    %383 = vdwg.mxu0
    %v384 = vmax.f32 %v226, 0.0
    %v385 = vmax.f32 %v231, 0.0
    %v386 = vmax.f32 %v236, 0.0
    %v387 = vmax.f32 %v241, 0.0
    %v388 = vmax.f32 %v246, 0.0
    %v389 = vmax.f32 %v251, 0.0
    %v390 = vmax.f32 %v256, 0.0
    %v391 = vmax.f32 %v261, 0.0
    %v392 = vmax.f32 %v266, 0.0
    %v393 = vmax.f32 %v271, 0.0
    %v394 = vmax.f32 %v276, 0.0
    %v395 = vmax.f32 %v281, 0.0
    %v396 = vmax.f32 %v286, 0.0
    %v397 = vmax.f32 %v291, 0.0
    %v398 = vmax.f32 %v296, 0.0
    %v399 = vmax.f32 %v301, 0.0
    %v400 = vmax.f32 %v306, 0.0
    %v401 = vmax.f32 %v311, 0.0
    %v402 = vmax.f32 %v316, 0.0
    %v403 = vmax.f32 %v321, 0.0
    %v404 = vmax.f32 %v326, 0.0
    %v405 = vmax.f32 %v331, 0.0
    %v406 = vmax.f32 %v336, 0.0
    %v407 = vmax.f32 %v341, 0.0
    %v408 = vmax.f32 %v346, 0.0
    %v409 = vmax.f32 %v351, 0.0
    %v410 = vmax.f32 %v356, 0.0
    %v411 = vmax.f32 %v361, 0.0
    %v412 = vmax.f32 %v366, 0.0
    %v413 = vmax.f32 %v371, 0.0
    %v414 = vmax.f32 %v376, 0.0
    %v415 = vmax.f32 %v381, 0.0
    %v416 = vld [vmem:[%s3] sm:$0xff]
    %v417 = vld [vmem:[%s3 + $0x8] sm:$0xff]
    %v418 = vld [vmem:[%s3 + $0x10] sm:$0xff]
    %v419 = vld [vmem:[%s3 + $0x18] sm:$0xff]
    %v420 = vld [vmem:[%s3 + $0x20] sm:$0xff]
    %v421 = vld [vmem:[%s3 + $0x28] sm:$0xff]
    %v422 = vld [vmem:[%s3 + $0x30] sm:$0xff]
    %v423 = vld [vmem:[%s3 + $0x38] sm:$0xff]
    %v424 = vld [vmem:[%s3 + $0x40] sm:$0xff]
    %v425 = vld [vmem:[%s3 + $0x48] sm:$0xff]
    %v426 = vld [vmem:[%s3 + $0x50] sm:$0xff]
    %v427 = vld [vmem:[%s3 + $0x58] sm:$0xff]
    %v428 = vld [vmem:[%s3 + $0x60] sm:$0xff]
    %v429 = vld [vmem:[%s3 + $0x68] sm:$0xff]
    %v430 = vld [vmem:[%s3 + $0x70] sm:$0xff]
    %v431 = vld [vmem:[%s3 + $0x78] sm:$0xff]
    %v432 = vld [vmem:[%s4] sm:$0x1]
    %v434 = vlaneseq
    %v435 = vshrl.u32 %v434, 7
    %v436 = vsub.s32 0, %v435
    %v437 = vrot.slane %v432, %v436
    %439 = vmatprep.subr.mxu0 0.0
    %440 = vmatpush1.msra.mxu0 %v416
    %441 = vmatprep.subr.mxu0 0.0
    %442 = vmatpush1.msra.mxu0 %v417
    %443 = vmatprep.subr.mxu0 0.0
    %444 = vmatpush1.msra.mxu0 %v418
    %445 = vmatprep.subr.mxu0 0.0
    %446 = vmatpush1.msra.mxu0 %v419
    %447 = vmatprep.subr.mxu0 0.0
    %448 = vmatpush1.msra.mxu0 %v420
    %449 = vmatprep.subr.mxu0 0.0
    %450 = vmatpush1.msra.mxu0 %v421
    %451 = vmatprep.subr.mxu0 0.0
    %452 = vmatpush1.msra.mxu0 %v422
    %453 = vmatprep.subr.mxu0 0.0
    %454 = vmatpush1.msra.mxu0 %v423
    %455 = vmatprep.subr.mxu0 0.0
    %456 = vmatpush1.msra.mxu0 %v424
    %457 = vmatprep.subr.mxu0 0.0
    %458 = vmatpush1.msra.mxu0 %v425
    %459 = vmatprep.subr.mxu0 0.0
    %460 = vmatpush1.msra.mxu0 %v426
    %461 = vmatprep.subr.mxu0 0.0
    %462 = vmatpush1.msra.mxu0 %v427
    %463 = vmatprep.subr.mxu0 0.0
    %464 = vmatpush1.msra.mxu0 %v428
    %465 = vmatprep.subr.mxu0 0.0
    %466 = vmatpush1.msra.mxu0 %v429
    %467 = vmatprep.subr.mxu0 0.0
    %468 = vmatpush1.msra.mxu0 %v430
    %469 = vmatprep.subr.mxu0 0.0
    %470 = vmatpush1.msra.mxu0 %v431
    %471 = vmatprep.subr.mxu0 0.0
    %472 = vmatpush1.msra.mxu0 0.0
    %473 = vmatprep.subr.mxu0 0.0
    %474 = vmatpush1.msra.mxu0 0.0
    %475 = vmatprep.subr.mxu0 0.0
    %476 = vmatpush1.msra.mxu0 0.0
    %477 = vmatprep.subr.mxu0 0.0
    %478 = vmatpush1.msra.mxu0 0.0
    %479 = vmatprep.subr.mxu0 0.0
    %480 = vmatpush1.msra.mxu0 0.0
    %481 = vmatprep.subr.mxu0 0.0
    %482 = vmatpush1.msra.mxu0 0.0
    %483 = vmatprep.subr.mxu0 0.0
    %484 = vmatpush1.msra.mxu0 0.0
    %485 = vmatprep.subr.mxu0 0.0
    %486 = vmatpush1.msra.mxu0 0.0
    %487 = vmatprep.subr.mxu0 0.0
    %488 = vmatpush1.msra.mxu0 0.0
    %489 = vmatprep.subr.mxu0 0.0
    %490 = vmatpush1.msra.mxu0 0.0
    %491 = vmatprep.subr.mxu0 0.0
    %492 = vmatpush1.msra.mxu0 0.0
    %493 = vmatprep.subr.mxu0 0.0
    %494 = vmatpush1.msra.mxu0 0.0
    %495 = vmatprep.subr.mxu0 0.0
    %496 = vmatpush1.msra.mxu0 0.0
    %497 = vmatprep.subr.mxu0 0.0
    %498 = vmatpush1.msra.mxu0 0.0
    %499 = vmatprep.subr.mxu0 0.0
    %500 = vmatpush1.msra.mxu0 0.0
    %501 = vmatprep.subr.mxu0 0.0
    %502 = vmatpush1.msra.mxu0 0.0
    %503 = vmatprep.mubr.f32.mxu0 0.0
    %504 = vmatmul.mubr.f32.gmra.mrb[0].mxu0 %v384
    %v505 = vpop.f32.mrb[0].mxu0
    %v506 = vadd.f32 %v437, %v505
    %v507 = vpop.f32.mrb[0].mxu0
    %508 = vmatprep.mubr.f32.mxu0 0.0
    %509 = vmatmul.mubr.f32.gmra.mrb[0].mxu0 %v385
    %v510 = vpop.f32.mrb[0].mxu0
    %v511 = vadd.f32 %v437, %v510
    %v512 = vpop.f32.mrb[0].mxu0
    %513 = vmatprep.mubr.f32.mxu0 0.0
    %514 = vmatmul.mubr.f32.gmra.mrb[0].mxu0 %v386
    %v515 = vpop.f32.mrb[0].mxu0
    %v516 = vadd.f32 %v437, %v515
    %v517 = vpop.f32.mrb[0].mxu0
    %518 = vmatprep.mubr.f32.mxu0 0.0
    %519 = vmatmul.mubr.f32.gmra.mrb[0].mxu0 %v387
    %v520 = vpop.f32.mrb[0].mxu0
    %v521 = vadd.f32 %v437, %v520
    %v522 = vpop.f32.mrb[0].mxu0
    %523 = vmatprep.mubr.f32.mxu0 0.0
    %524 = vmatmul.mubr.f32.gmra.mrb[0].mxu0 %v388
    %v525 = vpop.f32.mrb[0].mxu0
    %v526 = vadd.f32 %v437, %v525
    %v527 = vpop.f32.mrb[0].mxu0
    %528 = vmatprep.mubr.f32.mxu0 0.0
    %529 = vmatmul.mubr.f32.gmra.mrb[0].mxu0 %v389
    %v530 = vpop.f32.mrb[0].mxu0
    %v531 = vadd.f32 %v437, %v530
    %v532 = vpop.f32.mrb[0].mxu0
    %533 = vmatprep.mubr.f32.mxu0 0.0
    %534 = vmatmul.mubr.f32.gmra.mrb[0].mxu0 %v390
    %v535 = vpop.f32.mrb[0].mxu0
    %v536 = vadd.f32 %v437, %v535
    %v537 = vpop.f32.mrb[0].mxu0
    %538 = vmatprep.mubr.f32.mxu0 0.0
    %539 = vmatmul.mubr.f32.gmra.mrb[0].mxu0 %v391
    %v540 = vpop.f32.mrb[0].mxu0
    %v541 = vadd.f32 %v437, %v540
    %v542 = vpop.f32.mrb[0].mxu0
    %543 = vmatprep.mubr.f32.mxu0 0.0
    %544 = vmatmul.mubr.f32.gmra.mrb[0].mxu0 %v392
    %v545 = vpop.f32.mrb[0].mxu0
    %v546 = vadd.f32 %v437, %v545
    %v547 = vpop.f32.mrb[0].mxu0
    %548 = vmatprep.mubr.f32.mxu0 0.0
    %549 = vmatmul.mubr.f32.gmra.mrb[0].mxu0 %v393
    %v550 = vpop.f32.mrb[0].mxu0
    %v551 = vadd.f32 %v437, %v550
    %v552 = vpop.f32.mrb[0].mxu0
    %553 = vmatprep.mubr.f32.mxu0 0.0
    %554 = vmatmul.mubr.f32.gmra.mrb[0].mxu0 %v394
    %v555 = vpop.f32.mrb[0].mxu0
    %v556 = vadd.f32 %v437, %v555
    %v557 = vpop.f32.mrb[0].mxu0
    %558 = vmatprep.mubr.f32.mxu0 0.0
    %559 = vmatmul.mubr.f32.gmra.mrb[0].mxu0 %v395
    %v560 = vpop.f32.mrb[0].mxu0
    %v561 = vadd.f32 %v437, %v560
    %v562 = vpop.f32.mrb[0].mxu0
    %563 = vmatprep.mubr.f32.mxu0 0.0
    %564 = vmatmul.mubr.f32.gmra.mrb[0].mxu0 %v396
    %v565 = vpop.f32.mrb[0].mxu0
    %v566 = vadd.f32 %v437, %v565
    %v567 = vpop.f32.mrb[0].mxu0
    %568 = vmatprep.mubr.f32.mxu0 0.0
    %569 = vmatmul.mubr.f32.gmra.mrb[0].mxu0 %v397
    %v570 = vpop.f32.mrb[0].mxu0
    %v571 = vadd.f32 %v437, %v570
    %v572 = vpop.f32.mrb[0].mxu0
    %573 = vmatprep.mubr.f32.mxu0 0.0
    %574 = vmatmul.mubr.f32.gmra.mrb[0].mxu0 %v398
    %v575 = vpop.f32.mrb[0].mxu0
    %v576 = vadd.f32 %v437, %v575
    %v577 = vpop.f32.mrb[0].mxu0
    %578 = vmatprep.mubr.f32.mxu0 0.0
    %579 = vmatmul.mubr.f32.gmra.mrb[0].mxu0 %v399
    %v580 = vpop.f32.mrb[0].mxu0
    %v581 = vadd.f32 %v437, %v580
    %v582 = vpop.f32.mrb[0].mxu0
    %583 = vmatprep.mubr.f32.mxu0 0.0
    %584 = vmatmul.mubr.f32.gmra.mrb[0].mxu0 %v400
    %v585 = vpop.f32.mrb[0].mxu0
    %v586 = vadd.f32 %v437, %v585
    %v587 = vpop.f32.mrb[0].mxu0
    %588 = vmatprep.mubr.f32.mxu0 0.0
    %589 = vmatmul.mubr.f32.gmra.mrb[0].mxu0 %v401
    %v590 = vpop.f32.mrb[0].mxu0
    %v591 = vadd.f32 %v437, %v590
    %v592 = vpop.f32.mrb[0].mxu0
    %593 = vmatprep.mubr.f32.mxu0 0.0
    %594 = vmatmul.mubr.f32.gmra.mrb[0].mxu0 %v402
    %v595 = vpop.f32.mrb[0].mxu0
    %v596 = vadd.f32 %v437, %v595
    %v597 = vpop.f32.mrb[0].mxu0
    %598 = vmatprep.mubr.f32.mxu0 0.0
    %599 = vmatmul.mubr.f32.gmra.mrb[0].mxu0 %v403
    %v600 = vpop.f32.mrb[0].mxu0
    %v601 = vadd.f32 %v437, %v600
    %v602 = vpop.f32.mrb[0].mxu0
    %603 = vmatprep.mubr.f32.mxu0 0.0
    %604 = vmatmul.mubr.f32.gmra.mrb[0].mxu0 %v404
    %v605 = vpop.f32.mrb[0].mxu0
    %v606 = vadd.f32 %v437, %v605
    %v607 = vpop.f32.mrb[0].mxu0
    %608 = vmatprep.mubr.f32.mxu0 0.0
    %609 = vmatmul.mubr.f32.gmra.mrb[0].mxu0 %v405
    %v610 = vpop.f32.mrb[0].mxu0
    %v611 = vadd.f32 %v437, %v610
    %v612 = vpop.f32.mrb[0].mxu0
    %613 = vmatprep.mubr.f32.mxu0 0.0
    %614 = vmatmul.mubr.f32.gmra.mrb[0].mxu0 %v406
    %v615 = vpop.f32.mrb[0].mxu0
    %v616 = vadd.f32 %v437, %v615
    %v617 = vpop.f32.mrb[0].mxu0
    %618 = vmatprep.mubr.f32.mxu0 0.0
    %619 = vmatmul.mubr.f32.gmra.mrb[0].mxu0 %v407
    %v620 = vpop.f32.mrb[0].mxu0
    %v621 = vadd.f32 %v437, %v620
    %v622 = vpop.f32.mrb[0].mxu0
    %623 = vmatprep.mubr.f32.mxu0 0.0
    %624 = vmatmul.mubr.f32.gmra.mrb[0].mxu0 %v408
    %v625 = vpop.f32.mrb[0].mxu0
    %v626 = vadd.f32 %v437, %v625
    %v627 = vpop.f32.mrb[0].mxu0
    %628 = vmatprep.mubr.f32.mxu0 0.0
    %629 = vmatmul.mubr.f32.gmra.mrb[0].mxu0 %v409
    %v630 = vpop.f32.mrb[0].mxu0
    %v631 = vadd.f32 %v437, %v630
    %v632 = vpop.f32.mrb[0].mxu0
    %633 = vmatprep.mubr.f32.mxu0 0.0
    %634 = vmatmul.mubr.f32.gmra.mrb[0].mxu0 %v410
    %v635 = vpop.f32.mrb[0].mxu0
    %v636 = vadd.f32 %v437, %v635
    %v637 = vpop.f32.mrb[0].mxu0
    %638 = vmatprep.mubr.f32.mxu0 0.0
    %639 = vmatmul.mubr.f32.gmra.mrb[0].mxu0 %v411
    %v640 = vpop.f32.mrb[0].mxu0
    %v641 = vadd.f32 %v437, %v640
    %v642 = vpop.f32.mrb[0].mxu0
    %643 = vmatprep.mubr.f32.mxu0 0.0
    %644 = vmatmul.mubr.f32.gmra.mrb[0].mxu0 %v412
    %v645 = vpop.f32.mrb[0].mxu0
    %v646 = vadd.f32 %v437, %v645
    %v647 = vpop.f32.mrb[0].mxu0
    %648 = vmatprep.mubr.f32.mxu0 0.0
    %649 = vmatmul.mubr.f32.gmra.mrb[0].mxu0 %v413
    %v650 = vpop.f32.mrb[0].mxu0
    %v651 = vadd.f32 %v437, %v650
    %v652 = vpop.f32.mrb[0].mxu0
    %653 = vmatprep.mubr.f32.mxu0 0.0
    %654 = vmatmul.mubr.f32.gmra.mrb[0].mxu0 %v414
    %v655 = vpop.f32.mrb[0].mxu0
    %v656 = vadd.f32 %v437, %v655
    %v657 = vpop.f32.mrb[0].mxu0
    %658 = vmatprep.mubr.f32.mxu0 0.0
    %659 = vmatmul.mubr.f32.gmra.mrb[0].mxu0 %v415
    %v660 = vpop.f32.mrb[0].mxu0
    %v661 = vadd.f32 %v437, %v660
    %v662 = vpop.f32.mrb[0].mxu0
    %663 = vdwg.mxu0
    %664 = vst [vmem:[#allocation2] sm:$0xff] %v506
    %665 = vst [vmem:[#allocation2 + $0x8] sm:$0xff] %v511
    %666 = vst [vmem:[#allocation2 + $0x10] sm:$0xff] %v516
    %667 = vst [vmem:[#allocation2 + $0x18] sm:$0xff] %v521
    %668 = vst [vmem:[#allocation2 + $0x20] sm:$0xff] %v526
    %669 = vst [vmem:[#allocation2 + $0x28] sm:$0xff] %v531
    %670 = vst [vmem:[#allocation2 + $0x30] sm:$0xff] %v536
    %671 = vst [vmem:[#allocation2 + $0x38] sm:$0xff] %v541
    %672 = vst [vmem:[#allocation2 + $0x40] sm:$0xff] %v546
    %673 = vst [vmem:[#allocation2 + $0x48] sm:$0xff] %v551
    %674 = vst [vmem:[#allocation2 + $0x50] sm:$0xff] %v556
    %675 = vst [vmem:[#allocation2 + $0x58] sm:$0xff] %v561
    %676 = vst [vmem:[#allocation2 + $0x60] sm:$0xff] %v566
    %677 = vst [vmem:[#allocation2 + $0x68] sm:$0xff] %v571
    %678 = vst [vmem:[#allocation2 + $0x70] sm:$0xff] %v576
    %679 = vst [vmem:[#allocation2 + $0x78] sm:$0xff] %v581
    %680 = vst [vmem:[#allocation2 + $0x80] sm:$0xff] %v586
    %681 = vst [vmem:[#allocation2 + $0x88] sm:$0xff] %v591
    %682 = vst [vmem:[#allocation2 + $0x90] sm:$0xff] %v596
    %683 = vst [vmem:[#allocation2 + $0x98] sm:$0xff] %v601
    %684 = vst [vmem:[#allocation2 + $0xa0] sm:$0xff] %v606
    %685 = vst [vmem:[#allocation2 + $0xa8] sm:$0xff] %v611
    %686 = vst [vmem:[#allocation2 + $0xb0] sm:$0xff] %v616
    %687 = vst [vmem:[#allocation2 + $0xb8] sm:$0xff] %v621
    %688 = vst [vmem:[#allocation2 + $0xc0] sm:$0xff] %v626
    %689 = vst [vmem:[#allocation2 + $0xc8] sm:$0xff] %v631
    %690 = vst [vmem:[#allocation2 + $0xd0] sm:$0xff] %v636
    %691 = vst [vmem:[#allocation2 + $0xd8] sm:$0xff] %v641
    %692 = vst [vmem:[#allocation2 + $0xe0] sm:$0xff] %v646
    %693 = vst [vmem:[#allocation2 + $0xe8] sm:$0xff] %v651
    %694 = vst [vmem:[#allocation2 + $0xf0] sm:$0xff] %v656
    %695 = vst [vmem:[#allocation2 + $0xf8] sm:$0xff] %v661
    // Predicated region
    $region22: #{tpu_custom_call.1} parent=1 // pred_check
      _
    $region23: #{tpu_custom_call.1} parent=1 // pred_check_branch
      %697 = sbr.rel (0) target = $region25
    $region24: #{tpu_custom_call.1} parent=1 // pred_region
      %s699 = ssub.s32 4096, 4096
      %700 = vsyncadd [#allocation3], %s699
      %s701 = sshll.u32 [#allocation2], 4
      %s702 = int_to_ptr.vmem [resolvable:$true] %s701
      %707 = dma.vmem_to_hbm [thread:$0]  %s702, 4096, %s5, [#allocation3], 128, 128, 8
    $region25: #{tpu_custom_call.1} parent=1 // pred_fallthru
      _
    // Predicated region
    $region26: #{tpu_custom_call.1} parent=1 // pred_check
      _
    $region27: #{tpu_custom_call.1} parent=1 // pred_check_branch
      %709 = sbr.rel (0) target = $region29
    $region28: #{tpu_custom_call.1} parent=1 // pred_region
      %710 = dma.done [#allocation3], 4096
    $region29: #{tpu_custom_call.1} parent=1 // pred_fallthru
      _
    %711 = vsyncpa [#allocation3], 1

</llo_original>
